<compile_context>
chip_gen: v6e
topology: v6e:2x2x1
jax: 0.10.0
libtpu: 0.0.40
codegen_flags: <defaults>
</compile_context>

<pallas_src>
import functools
import math

import jax
import jax.numpy as jnp
from jax.experimental import pallas as pl
from jax.experimental.pallas import tpu as pltpu

BN_EPS = 1e-5

# (in_ch, out_ch, kernel_size, stride, num_layers) — from EfficientNet1D.__init__
STAGES = (
    (32, 64, 3, 1, 1),
    (64, 128, 3, 2, 2),
    (128, 256, 5, 2, 2),
    (256, 512, 3, 2, 3),
    (512, 1024, 5, 1, 3),
    (1024, 1280, 3, 2, 1),
)


def _choose_tile(d, max_tile, granularity=128):
    """Largest multiple-of-`granularity` divisor of d that is <= max_tile, else d (full dim)."""
    if d <= max_tile:
        return d
    t = (max_tile // granularity) * granularity
    while t >= granularity:
        if d % t == 0:
            return t
        t -= granularity
    # No clean divisor: fall back to the full dim (legal via the full-dim exemption, but then
    # the VMEM footprint scales with d).  Never hit for this network's channel counts.
    return d


def _choose_l_tile(l, max_tile=256):
    """Length-axis tile: multiple of 8 dividing l, else the full length (full-dim exemption)."""
    for t in (256, 128, 64, 32, 16, 8):
        if t <= max_tile and l % t == 0:
            return t
    return l


def _sigmoid(y):
    # Numerically-stable sigmoid mapped to the EUP tanh unit (no f32 divide, no exp overflow).
    return 0.5 * (jnp.tanh(0.5 * y) + 1.0)


def _silu(y):
    return y * _sigmoid(y)


# ----------------------------------------------------------------------------
# Kernel A: tiled matmul + per-output-channel scale/bias (+ optional SiLU).
#           Used for the stem conv (via im2col) and every expand 1x1 conv (+BN).
#           bf16 operands on the MXU, f32 accumulation, f32 epilogue.
# ----------------------------------------------------------------------------
def _make_matmul_kernel(activation):
    def kernel(x_ref, w_ref, scale_ref, bias_ref, out_ref, acc_ref):
        @pl.when(pl.program_id(2) == 0)
        def _init():
            acc_ref[...] = jnp.zeros_like(acc_ref)

        acc_ref[...] += jnp.dot(x_ref[...].astype(jnp.bfloat16), w_ref[...],
                                preferred_element_type=jnp.float32)

        @pl.when(pl.program_id(2) == pl.num_programs(2) - 1)
        def _epilogue():
            y = acc_ref[...] * scale_ref[...] + bias_ref[...]
            if activation == "silu":
                y = _silu(y)
            out_ref[...] = y.astype(out_ref.dtype)

    return kernel


@functools.partial(jax.jit, static_argnames=("activation", "out_dtype"))
def fused_matmul(x, w, scale, bias, *, activation=None, out_dtype=jnp.bfloat16):
    """out = act((x @ w) * scale + bias).  x:(M,K), w:(K,N) bf16, out in `out_dtype`."""
    M, K = x.shape
    _, N = w.shape
    tm = _choose_tile(M, 512, granularity=8)
    tk = _choose_tile(K, 512)
    tn = _choose_tile(N, 1024)
    grid = (M // tm, N // tn, K // tk)

    return pl.pallas_call(
        _make_matmul_kernel(activation),
        out_shape=jax.ShapeDtypeStruct((M, N), out_dtype),
        grid=grid,
        in_specs=[
            pl.BlockSpec((tm, tk), lambda m, n, k: (m, k)),
            pl.BlockSpec((tk, tn), lambda m, n, k: (k, n)),
            pl.BlockSpec((1, tn), lambda m, n, k: (0, n)),
            pl.BlockSpec((1, tn), lambda m, n, k: (0, n)),
        ],
        out_specs=pl.BlockSpec((tm, tn), lambda m, n, k: (m, n)),
        scratch_shapes=[pltpu.VMEM((tm, tn), jnp.float32)],
        compiler_params=pltpu.CompilerParams(
            dimension_semantics=("parallel", "parallel", "arbitrary")),
    )(x, w, scale.reshape(1, N), bias.reshape(1, N))


# ----------------------------------------------------------------------------
# Kernel B: depthwise conv1d (groups == channels) + BN + SiLU, fused with the
#           global-average pool needed by the following SE layer.
#           Taps are read directly from the padded input (strided pl.ds when
#           stride > 1), channel-tiled grid = (B, C/tc).
# TODO(synk): for very long audio (L_pad * tc exceeding VMEM) add an output-length
#             grid axis with halo'd input windows (manual DMA) and a pooled-sum finalize.
# ----------------------------------------------------------------------------
def _dwconv_kernel(kernel_size, stride, l_out,
                   x_ref, w_ref, scale_ref, bias_ref, out_ref, pooled_ref):
    # x_ref: (L_pad, tc) (batch dim squeezed); w_ref: (K, tc) f32.
    acc = jnp.zeros(out_ref.shape[1:], jnp.float32)              # (Lo, tc)
    for t in range(kernel_size):                                 # static unroll (K <= 7)
        if stride == 1:
            tap = x_ref[t:t + l_out, :]                          # contiguous slice
        else:
            tap = x_ref[pl.ds(t, l_out, stride), :]              # strided sublane read
        acc = acc + tap.astype(jnp.float32) * w_ref[t:t + 1, :]
    y = acc * scale_ref[...] + bias_ref[...]
    y = _silu(y)
    out_ref[...] = y[None].astype(out_ref.dtype)
    pooled_ref[...] = jnp.mean(y, axis=0, keepdims=True).astype(pooled_ref.dtype)


@functools.partial(jax.jit, static_argnames=("kernel_size", "stride"))
def dwconv_bn_silu(x, w_dw, scale, bias, *, kernel_size, stride):
    """x: (B, L, C) channels-last.  w_dw: (K, C) f32.  Returns (out bf16, pooled f32)."""
    B, L, C = x.shape
    K = kernel_size
    pad = K // 2
    Lo = (L + 2 * pad - K) // stride + 1
    L_pad = L + 2 * pad
    x_pad = jnp.pad(x, ((0, 0), (pad, pad), (0, 0)))

    tc = _choose_tile(C, 512)
    grid = (B, C // tc)
    kernel = functools.partial(_dwconv_kernel, K, stride, Lo)

    out, pooled = pl.pallas_call(
        kernel,
        out_shape=(jax.ShapeDtypeStruct((B, Lo, C), jnp.bfloat16),
                   jax.ShapeDtypeStruct((B, C), jnp.float32)),
        grid=grid,
        in_specs=[
            pl.BlockSpec((None, L_pad, tc), lambda b, c: (b, 0, c)),
            pl.BlockSpec((K, tc), lambda b, c: (0, c)),
            pl.BlockSpec((1, tc), lambda b, c: (0, c)),
            pl.BlockSpec((1, tc), lambda b, c: (0, c)),
        ],
        out_specs=(pl.BlockSpec((1, Lo, tc), lambda b, c: (b, 0, c)),
                   pl.BlockSpec((1, tc), lambda b, c: (b, c))),
        compiler_params=pltpu.CompilerParams(
            dimension_semantics=("parallel", "parallel")),
    )(x_pad, w_dw, scale.reshape(1, C), bias.reshape(1, C))
    return out, pooled


# ----------------------------------------------------------------------------
# Kernel C: SE excitation — both fully-connected layers fused in one grid-less
#           call (M = batch, everything resident in VMEM; <= ~10 MiB of weights).
#           gate = sigmoid(silu(pooled @ w1 + b1) @ w2 + b2)
# ----------------------------------------------------------------------------
def _se_fc_kernel(p_ref, w1_ref, b1_ref, w2_ref, b2_ref, out_ref):
    h = jnp.dot(p_ref[...].astype(jnp.bfloat16), w1_ref[...],
                preferred_element_type=jnp.float32) + b1_ref[...]
    h = _silu(h)
    y = jnp.dot(h.astype(jnp.bfloat16), w2_ref[...],
                preferred_element_type=jnp.float32) + b2_ref[...]
    out_ref[...] = _sigmoid(y).astype(out_ref.dtype)


@jax.jit
def se_gate(pooled, w1, b1, w2, b2):
    B, C = pooled.shape
    cr = w1.shape[1]
    return pl.pallas_call(
        _se_fc_kernel,
        out_shape=jax.ShapeDtypeStruct((B, C), jnp.float32),
    )(pooled, w1, b1.reshape(1, cr), w2, b2.reshape(1, C))


# ----------------------------------------------------------------------------
# Kernel D: gated projection — SE channel re-scaling fused into the project
#           1x1 conv + BN (+ optional residual).  Grid = (B, L/tl, N/tn, K/tk),
#           k innermost accumulation; the length axis is tiled so VMEM does not
#           scale with the sequence length.
# ----------------------------------------------------------------------------
def _make_gated_proj_kernel(has_residual):
    def kernel(*refs):
        if has_residual:
            x_ref, g_ref, w_ref, scale_ref, bias_ref, res_ref, out_ref, acc_ref = refs
        else:
            x_ref, g_ref, w_ref, scale_ref, bias_ref, out_ref, acc_ref = refs
            res_ref = None

        @pl.when(pl.program_id(3) == 0)
        def _init():
            acc_ref[...] = jnp.zeros_like(acc_ref)

        xg = x_ref[0].astype(jnp.float32) * g_ref[0]              # (tl, tk) * (1, tk)
        acc_ref[...] += jnp.dot(xg.astype(jnp.bfloat16), w_ref[...],
                                preferred_element_type=jnp.float32)

        @pl.when(pl.program_id(3) == pl.num_programs(3) - 1)
        def _epilogue():
            y = acc_ref[...] * scale_ref[...] + bias_ref[...]
            if has_residual:
                y = y + res_ref[0].astype(jnp.float32)
            out_ref[...] = y[None].astype(out_ref.dtype)

    return kernel


@jax.jit
def gated_projection(x, gate, w, scale, bias, residual=None):
    """out[b] = ((x[b] * gate[b]) @ w) * scale + bias [+ residual[b]], out in bf16."""
    B, L, K = x.shape
    _, N = w.shape
    tk = _choose_tile(K, 512)
    tn = _choose_tile(N, 1024)
    tl = _choose_l_tile(L, 256)
    grid = (B, L // tl, N // tn, K // tk)

    in_specs = [
        pl.BlockSpec((1, tl, tk), lambda b, l, n, k: (b, l, k)),
        pl.BlockSpec((1, 1, tk), lambda b, l, n, k: (b, 0, k)),
        pl.BlockSpec((tk, tn), lambda b, l, n, k: (k, n)),
        pl.BlockSpec((1, tn), lambda b, l, n, k: (0, n)),
        pl.BlockSpec((1, tn), lambda b, l, n, k: (0, n)),
    ]
    args = [x, gate.reshape(B, 1, K), w, scale.reshape(1, N), bias.reshape(1, N)]
    if residual is not None:
        in_specs.append(pl.BlockSpec((1, tl, tn), lambda b, l, n, k: (b, l, n)))
        args.append(residual)

    return pl.pallas_call(
        _make_gated_proj_kernel(residual is not None),
        out_shape=jax.ShapeDtypeStruct((B, L, N), jnp.bfloat16),
        grid=grid,
        in_specs=in_specs,
        out_specs=pl.BlockSpec((1, tl, tn), lambda b, l, n, k: (b, l, n)),
        scratch_shapes=[pltpu.VMEM((tl, tn), jnp.float32)],
        compiler_params=pltpu.CompilerParams(
            dimension_semantics=("parallel", "parallel", "parallel", "arbitrary")),
    )(*args)


# ----------------------------------------------------------------------------
# Kernel E: head — AdaptiveAvgPool1d(1) over length fused with the classifier
#           Linear in a single grid-less call (Dropout(0.2) is identity in eval).
# TODO(synk): tile the length axis if (B, L, 1280) ever exceeds VMEM for long audio.
# ----------------------------------------------------------------------------
def _pool_head_kernel(x_ref, w_ref, b_ref, out_ref):
    pooled = jnp.mean(x_ref[...].astype(jnp.float32), axis=1)     # (B, C)
    logits = jnp.dot(pooled.astype(jnp.bfloat16), w_ref[...],
                     preferred_element_type=jnp.float32) + b_ref[...]
    out_ref[...] = logits.astype(out_ref.dtype)


@jax.jit
def global_pool_head(x, w_head, b_head):
    B, L, C = x.shape
    nc = w_head.shape[1]
    return pl.pallas_call(
        _pool_head_kernel,
        out_shape=jax.ShapeDtypeStruct((B, nc), jnp.float32),
    )(x, w_head, b_head.reshape(1, nc))


# ----------------------------------------------------------------------------
# Deterministic parameter construction (synthetic — no checkpoint loading).
# BN (gamma, beta, running_mean, running_var) is folded into per-channel
# scale / bias: scale = gamma / sqrt(var + eps), bias = beta - mean * scale.
# Matmul weights are stored in bf16 (MXU native); elementwise params stay f32.
# ----------------------------------------------------------------------------
class _KeyGen:
    def __init__(self, key):
        self._key = key

    def __call__(self):
        self._key, sub = jax.random.split(self._key)
        return sub


def _bn_params(kg, c):
    gamma = 1.0 + 0.1 * jax.random.normal(kg(), (c,), jnp.float32)
    beta = 0.1 * jax.random.normal(kg(), (c,), jnp.float32)
    mean = 0.1 * jax.random.normal(kg(), (c,), jnp.float32)
    var = 1.0 + 0.1 * jnp.abs(jax.random.normal(kg(), (c,), jnp.float32))
    scale = gamma / jnp.sqrt(var + BN_EPS)
    bias = beta - mean * scale
    return scale, bias


def _weight(kg, fan_in, shape, dtype=jnp.bfloat16):
    w = jax.random.normal(kg(), shape, jnp.float32) * (1.0 / math.sqrt(fan_in))
    return w.astype(dtype)


def _mbconv_params(kg, in_ch, out_ch, k):
    hidden = in_ch * 6                       # expand_ratio = 6
    cr = hidden // 16                        # SE reduction = 16
    p = {
        "in_ch": in_ch, "out_ch": out_ch, "kernel_size": k, "hidden": hidden,
        "w_exp": _weight(kg, in_ch, (in_ch, hidden)),
        "w_dw": _weight(kg, k, (k, hidden), dtype=jnp.float32),
        "w_se1": _weight(kg, hidden, (hidden, cr)),
        "b_se1": 0.1 * jax.random.normal(kg(), (cr,), jnp.float32),
        "w_se2": _weight(kg, cr, (cr, hidden)),
        "b_se2": 0.1 * jax.random.normal(kg(), (hidden,), jnp.float32),
        "w_proj": _weight(kg, hidden, (hidden, out_ch)),
    }
    p["s_exp"], p["b_exp"] = _bn_params(kg, hidden)
    p["s_dw"], p["b_dw"] = _bn_params(kg, hidden)
    p["s_proj"], p["b_proj"] = _bn_params(kg, out_ch)
    return p


def init_params(seed=0, in_channels=1, num_classes=16):
    kg = _KeyGen(jax.random.PRNGKey(seed))
    params = {
        "w_stem": _weight(kg, in_channels * 7, (in_channels * 7, 32)),
    }
    params["s_stem"], params["b_stem"] = _bn_params(kg, 32)
    blocks = []
    for (in_ch, out_ch, k, stride, num_layers) in STAGES:
        stage = []
        for i in range(num_layers):
            bi = in_ch if i == 0 else out_ch
            si = stride if i == 0 else 1
            stage.append((_mbconv_params(kg, bi, out_ch, k), si))
        blocks.append(stage)
    params["blocks"] = blocks
    params["w_head"] = _weight(kg, 1280, (1280, num_classes))
    params["b_head"] = 0.1 * jax.random.normal(kg(), (num_classes,), jnp.float32)
    return params


# ----------------------------------------------------------------------------
# Forward pass
# ----------------------------------------------------------------------------
def stem_forward(x_ncl, params):
    B, Cin, L = x_ncl.shape
    pad, K, stride = 3, 7, 2
    Lo = (L + 2 * pad - K) // stride + 1
    x_pad = jnp.pad(x_ncl, ((0, 0), (0, 0), (pad, pad)))
    # im2col glue for the (tiny single-channel) stem conv: (B, Cin, Lo, 7) -> (B*Lo, Cin*7)
    patches = jnp.stack(
        [x_pad[:, :, t:t + stride * Lo:stride] for t in range(K)], axis=-1)
    patches = patches.transpose(0, 2, 1, 3).reshape(B * Lo, Cin * K)
    h = fused_matmul(patches, params["w_stem"], params["s_stem"],
                     params["b_stem"], activation="silu",
                     out_dtype=jnp.bfloat16)
    return h.reshape(B, Lo, 32)


def mbconv_forward(x, p, stride):
    B, L, Cin = x.shape
    hidden, out_ch, k = p["hidden"], p["out_ch"], p["kernel_size"]
    use_res = (stride == 1) and (Cin == out_ch)

    # expand 1x1 conv + BN + SiLU.  Output stays bf16 except when the following
    # depthwise conv is strided, where it is written in f32 so the in-kernel
    # stride-2 sublane reads stay on the well-supported 32-bit path.
    dw_dtype = jnp.float32 if stride > 1 else jnp.bfloat16
    h = fused_matmul(x.reshape(B * L, Cin), p["w_exp"], p["s_exp"], p["b_exp"],
                     activation="silu", out_dtype=dw_dtype).reshape(B, L, hidden)
    # depthwise conv + BN + SiLU, fused with the SE global-average pool
    h, pooled = dwconv_bn_silu(h, p["w_dw"], p["s_dw"], p["b_dw"],
                               kernel_size=k, stride=stride)
    # SE: both FC layers in one kernel -> per-(batch, channel) sigmoid gate
    gate = se_gate(pooled, p["w_se1"], p["b_se1"], p["w_se2"], p["b_se2"])
    # project 1x1 conv + BN with the SE gate fused into the LHS (+ residual).
    # Dropout(0.1) = identity in eval mode.
    out = gated_projection(h, gate, p["w_proj"], p["s_proj"], p["b_proj"],
                           residual=x if use_res else None)
    return out


def efficientnet1d_forward(x_ncl, params):
    h = stem_forward(x_ncl, params)
    for stage in params["blocks"]:
        for p, stride in stage:
            h = mbconv_forward(h, p, stride)
    # head: AdaptiveAvgPool1d(1) + Flatten + Dropout(0.2)[eval: identity] + Linear
    # TODO(synk): per-block kernel fusion (dwconv + SE + projection) left for a follow-up.
    logits = global_pool_head(h, params["w_head"], params["b_head"])
    return logits


if __name__ == "__main__":
    B, C_IN, L, NUM_CLASSES = 2, 1, 64, 16
    x = jax.random.normal(jax.random.PRNGKey(0), (B, C_IN, L), jnp.float32)
    params = init_params(seed=0, in_channels=C_IN, num_classes=NUM_CLASSES)

    logits = efficientnet1d_forward(x, params)
    logits = jax.block_until_ready(logits)

    assert logits.shape == (B, NUM_CLASSES), logits.shape
    assert bool(jnp.all(jnp.isfinite(logits)))
    print("KERNEL_OK")
</pallas_src>

<mosaic_0001>
module attributes {stable_mosaic.version = 11 : i64} {
  func.func @kernel(%arg0: i32, %arg1: i32, %arg2: i32, %arg3: memref<64x7xf32, #tpu.memory_space<vmem>>, %arg4: memref<7x32xbf16, #tpu.memory_space<vmem>>, %arg5: memref<1x32xf32, #tpu.memory_space<vmem>>, %arg6: memref<1x32xf32, #tpu.memory_space<vmem>>, %arg7: memref<64x32xbf16, #tpu.memory_space<vmem>>, %arg8: memref<64x32xf32, #tpu.memory_space<vmem>>) attributes {dimension_semantics = [#tpu.dimension_semantics<parallel>, #tpu.dimension_semantics<parallel>, #tpu.dimension_semantics<arbitrary>], iteration_bounds = array<i64: 1, 1, 1>, scalar_prefetch = 0 : i64, scratch_operands = 1 : i64, tpu.core_type = #tpu.core_type<tc>, window_params = [{transform_indices = @transform_0, window_bounds = array<i64: 64, 7>}, {transform_indices = @transform_1, window_bounds = array<i64: 7, 32>}, {transform_indices = @transform_2, window_bounds = array<i64: 1, 32>}, {transform_indices = @transform_3, window_bounds = array<i64: 1, 32>}, {transform_indices = @transform_4, window_bounds = array<i64: 64, 32>}]} {
    %c0_i32 = arith.constant 0 : i32
    %0 = arith.cmpi eq, %arg2, %c0_i32 : i32
    %1 = arith.extui %0 : i1 to i32
    %c0_i32_0 = arith.constant 0 : i32
    %2 = arith.cmpi ne, %1, %c0_i32_0 : i32
    scf.if %2 {
      %cst_10 = arith.constant 0.000000e+00 : f32
      %13 = vector.broadcast %cst_10 : f32 to vector<64x32xf32>
      %c0_11 = arith.constant 0 : index
      %c0_12 = arith.constant 0 : index
      %14 = vector.load %arg8[%c0_11, %c0_12] : memref<64x32xf32, #tpu.memory_space<vmem>>, vector<64x32xf32>
      tpu.vector_store %arg8[%c0_11, %c0_12], %13 {strides = array<i32>} : memref<64x32xf32, #tpu.memory_space<vmem>>, vector<64x32xf32>,
    } else {
    }
    %c0 = arith.constant 0 : index
    %c0_1 = arith.constant 0 : index
    %3 = vector.load %arg8[%c0, %c0_1] : memref<64x32xf32, #tpu.memory_space<vmem>>, vector<64x32xf32>
    %c0_2 = arith.constant 0 : index
    %c0_3 = arith.constant 0 : index
    %4 = vector.load %arg3[%c0_2, %c0_3] : memref<64x7xf32, #tpu.memory_space<vmem>>, vector<64x7xf32>
    %5 = arith.truncf %4 : vector<64x7xf32> to vector<64x7xbf16>
    %c0_4 = arith.constant 0 : index
    %c0_5 = arith.constant 0 : index
    %6 = vector.load %arg4[%c0_4, %c0_5] : memref<7x32xbf16, #tpu.memory_space<vmem>>, vector<7x32xbf16>
    %cst = arith.constant dense<0.000000e+00> : vector<64x32xf32>
    %7 = tpu.matmul %5, %6, %cst {dimension_numbers = #tpu.dot_dimension_numbers<[1], [0], [0], [1], [0, 0, 1, 1], [], []>} : vector<64x7xbf16>, vector<7x32xbf16>, vector<64x32xf32> -> vector<64x32xf32>
    %8 = arith.addf %3, %7 : vector<64x32xf32>
    %c0_6 = arith.constant 0 : index
    %c0_7 = arith.constant 0 : index
    %9 = vector.load %arg8[%c0_6, %c0_7] : memref<64x32xf32, #tpu.memory_space<vmem>>, vector<64x32xf32>
    tpu.vector_store %arg8[%c0_6, %c0_7], %8 {strides = array<i32>} : memref<64x32xf32, #tpu.memory_space<vmem>>, vector<64x32xf32>,
    %c0_i32_8 = arith.constant 0 : i32
    %10 = arith.cmpi eq, %arg2, %c0_i32_8 : i32
    %11 = arith.extui %10 : i1 to i32
    %c0_i32_9 = arith.constant 0 : i32
    %12 = arith.cmpi ne, %11, %c0_i32_9 : i32
    scf.if %12 {
      %c0_10 = arith.constant 0 : index
      %c0_11 = arith.constant 0 : index
      %13 = vector.load %arg8[%c0_10, %c0_11] : memref<64x32xf32, #tpu.memory_space<vmem>>, vector<64x32xf32>
      %c0_12 = arith.constant 0 : index
      %c0_13 = arith.constant 0 : index
      %14 = vector.load %arg5[%c0_12, %c0_13] : memref<1x32xf32, #tpu.memory_space<vmem>>, vector<1x32xf32>
      %15 = vector.broadcast %14 : vector<1x32xf32> to vector<64x32xf32>
      %16 = arith.mulf %13, %15 : vector<64x32xf32>
      %c0_14 = arith.constant 0 : index
      %c0_15 = arith.constant 0 : index
      %17 = vector.load %arg6[%c0_14, %c0_15] : memref<1x32xf32, #tpu.memory_space<vmem>>, vector<1x32xf32>
      %18 = vector.broadcast %17 : vector<1x32xf32> to vector<64x32xf32>
      %19 = arith.addf %16, %18 : vector<64x32xf32>
      %cst_16 = arith.constant 5.000000e-01 : f32
      %20 = vector.broadcast %cst_16 : f32 to vector<64x32xf32>
      %21 = arith.mulf %20, %19 : vector<64x32xf32>
      %22 = math.tanh %21 : vector<64x32xf32>
      %cst_17 = arith.constant 1.000000e+00 : f32
      %23 = vector.broadcast %cst_17 : f32 to vector<64x32xf32>
      %24 = arith.addf %22, %23 : vector<64x32xf32>
      %cst_18 = arith.constant 5.000000e-01 : f32
      %25 = vector.broadcast %cst_18 : f32 to vector<64x32xf32>
      %26 = arith.mulf %25, %24 : vector<64x32xf32>
      %27 = arith.mulf %19, %26 : vector<64x32xf32>
      %28 = arith.truncf %27 : vector<64x32xf32> to vector<64x32xbf16>
      %c0_19 = arith.constant 0 : index
      %c0_20 = arith.constant 0 : index
      %29 = vector.load %arg7[%c0_19, %c0_20] : memref<64x32xbf16, #tpu.memory_space<vmem>>, vector<64x32xbf16>
      tpu.vector_store %arg7[%c0_19, %c0_20], %28 {strides = array<i32>} : memref<64x32xbf16, #tpu.memory_space<vmem>>, vector<64x32xbf16>,
    } else {
    }
    return
  }
  func.func @transform_0(%arg0: i32, %arg1: i32, %arg2: i32) -> (i32, i32) {
    %c0_i32 = arith.constant 0 : i32
    return %arg0, %arg2 : i32, i32
  }
  func.func @transform_1(%arg0: i32, %arg1: i32, %arg2: i32) -> (i32, i32) {
    %c0_i32 = arith.constant 0 : i32
    return %arg2, %arg1 : i32, i32
  }
  func.func @transform_2(%arg0: i32, %arg1: i32, %arg2: i32) -> (i32, i32) {
    %c0_i32 = arith.constant 0 : i32
    %c0_i32_0 = arith.constant 0 : i32
    return %c0_i32, %arg1 : i32, i32
  }
  func.func @transform_3(%arg0: i32, %arg1: i32, %arg2: i32) -> (i32, i32) {
    %c0_i32 = arith.constant 0 : i32
    %c0_i32_0 = arith.constant 0 : i32
    return %c0_i32, %arg1 : i32, i32
  }
  func.func @transform_4(%arg0: i32, %arg1: i32, %arg2: i32) -> (i32, i32) {
    %c0_i32 = arith.constant 0 : i32
    return %arg0, %arg1 : i32, i32
  }
}

</mosaic_0001>

<llo_original>
// kernel: fused_matmul.1
$region0: #{fused_matmul.1}
  #allocation0 [shape = 'u32[]', space=smem, size = 0x4, offset = 0x4, fixed_abs, tag = 'smem constant byte address 0x4 - core index']
  #allocation1 [shape = 'u32[144,128]{1,0:T(1,128)}', space=vmem, size = 0x12000, scoped, tag = 'internal scratch']
  #allocation2 [shape = 'f32[64,32]{1,0:T(8,128)}', space=vmem, size = 0x8000, scoped, tag = 'scratch operand']
  %s0 = inlined_call_operand.vmem [shape: f32[64,7], index: 0, kind: input, shape index: {}]
  %s1 = inlined_call_operand.vmem [shape: bf16[7,32], index: 1, kind: input, shape index: {}]
  %s2 = inlined_call_operand.vmem [shape: f32[1,32], index: 2, kind: input, shape index: {}]
  %s3 = inlined_call_operand.vmem [shape: f32[1,32], index: 3, kind: input, shape index: {}]
  %s4 = inlined_call_operand.vmem [shape: bf16[64,32], index: 4, kind: output, shape index: {}]
  %s5 = sld [smem:[#allocation0]]
  $region34: #{fused_matmul.1} parent=0
    _
  %s7 = ssub.s32 1, %s5
  %s8 = scalar_select 0, %s7, %s5
  // Predicated region
  $region2: #{fused_matmul.1} parent=0 // pred_check
    _
  $region3: #{fused_matmul.1} parent=0 // pred_check_branch
    %10 = sbr.rel (0) target = $region5
  $region4: #{fused_matmul.1} parent=0 // pred_region
    _
  $region5: #{fused_matmul.1} parent=0 // pred_fallthru
    _
  // Predicated region
  $region6: #{fused_matmul.1} parent=0 // pred_check
    _
  $region7: #{fused_matmul.1} parent=0 // pred_check_branch
    %12 = sbr.rel (0) target = $region9
  $region8: #{fused_matmul.1} parent=0 // pred_region
    _
  $region9: #{fused_matmul.1} parent=0 // pred_fallthru
    _
  // Predicated region
  $region10: #{fused_matmul.1} parent=0 // pred_check
    _
  $region11: #{fused_matmul.1} parent=0 // pred_check_branch
    %14 = sbr.rel (0) target = $region13
  $region12: #{fused_matmul.1} parent=0 // pred_region
    _
  $region13: #{fused_matmul.1} parent=0 // pred_fallthru
    _
  // Predicated region
  $region14: #{fused_matmul.1} parent=0 // pred_check
    _
  $region15: #{fused_matmul.1} parent=0 // pred_check_branch
    %16 = sbr.rel (0) target = $region17
  $region16: #{fused_matmul.1} parent=0 // pred_region
    _
  $region17: #{fused_matmul.1} parent=0 // pred_fallthru
    _
  %p18 = scmp.eq.s32.totalorder 0, 0
  // Predicated region
  $region18: #{fused_matmul.1} parent=0 // pred_check
    %p19 = pneg %p18
  $region19: #{fused_matmul.1} parent=0 // pred_check_branch
    %21 = sbr.rel (%p19) target = $region21
  $region20: #{fused_matmul.1} parent=0 // pred_region
    %vm22 = vcmask 261120
    %23 = vst.msk [vmem:[#allocation2] sm:$0xff] %vm22, 0.0
    %24 = vst.msk [vmem:[#allocation2 + $0x8] sm:$0xff] %vm22, 0.0
    %25 = vst.msk [vmem:[#allocation2 + $0x10] sm:$0xff] %vm22, 0.0
    %26 = vst.msk [vmem:[#allocation2 + $0x18] sm:$0xff] %vm22, 0.0
    %27 = vst.msk [vmem:[#allocation2 + $0x20] sm:$0xff] %vm22, 0.0
    %28 = vst.msk [vmem:[#allocation2 + $0x28] sm:$0xff] %vm22, 0.0
    %29 = vst.msk [vmem:[#allocation2 + $0x30] sm:$0xff] %vm22, 0.0
    %30 = vst.msk [vmem:[#allocation2 + $0x38] sm:$0xff] %vm22, 0.0
  $region21: #{fused_matmul.1} parent=0 // pred_fallthru
    _
  %v31 = vld [vmem:[#allocation2] sm:$0xff]
  %v32 = vld [vmem:[#allocation2 + $0x8] sm:$0xff]
  %v33 = vld [vmem:[#allocation2 + $0x10] sm:$0xff]
  %v34 = vld [vmem:[#allocation2 + $0x18] sm:$0xff]
  %v35 = vld [vmem:[#allocation2 + $0x20] sm:$0xff]
  %v36 = vld [vmem:[#allocation2 + $0x28] sm:$0xff]
  %v37 = vld [vmem:[#allocation2 + $0x30] sm:$0xff]
  %v38 = vld [vmem:[#allocation2 + $0x38] sm:$0xff]
  %v39 = vld [vmem:[%s0] sm:$0xff]
  %v40 = vld [vmem:[%s0 + $0x8] sm:$0xff]
  %v41 = vld [vmem:[%s0 + $0x10] sm:$0xff]
  %v42 = vld [vmem:[%s0 + $0x18] sm:$0xff]
  %v43 = vld [vmem:[%s0 + $0x20] sm:$0xff]
  %v44 = vld [vmem:[%s0 + $0x28] sm:$0xff]
  %v45 = vld [vmem:[%s0 + $0x30] sm:$0xff]
  %v46 = vld [vmem:[%s0 + $0x38] sm:$0xff]
  %v47 = vpack.c.bf16 %v40, %v39
  %v48 = vpack.c.bf16 %v42, %v41
  %v49 = vpack.c.bf16 %v44, %v43
  %v50 = vpack.c.bf16 %v46, %v45
  %v51 = vld [vmem:[%s1] sm:$0xf]
  %vm52 = vcmask 56320
  %v54 = vsel %vm52, %v47, 0
  %v57 = vsel %vm52, %v48, 0
  %v60 = vsel %vm52, %v49, 0
  %v63 = vsel %vm52, %v50, 0
  %vm65 = vcmask 1042432
  %vm66 = vcmask 1043456
  %v67 = vsel %vm65, 4294967295, 65535
  %v68 = vsel %vm66, %v67, 0
  %v70 = vand.u32 %v51, %v68
  %72 = vmatprep.subr.bf16.mxu0 0
  %73 = vmatpush1.bf16.msra.mxu0 0
  %74 = vmatprep.subr.bf16.mxu0 0
  %75 = vmatpush1.bf16.msra.mxu0 0
  %76 = vmatprep.subr.bf16.mxu0 0
  %77 = vmatpush1.bf16.msra.mxu0 0
  %78 = vmatprep.subr.bf16.mxu0 0
  %79 = vmatpush1.bf16.msra.mxu0 0
  %80 = vmatprep.subr.bf16.mxu0 0
  %81 = vmatpush1.bf16.msra.mxu0 0
  %82 = vmatprep.subr.bf16.mxu0 0
  %83 = vmatpush1.bf16.msra.mxu0 0
  %84 = vmatprep.subr.bf16.mxu0 0
  %85 = vmatpush1.bf16.msra.mxu0 0
  %86 = vmatprep.subr.bf16.mxu0 0
  %87 = vmatpush1.bf16.msra.mxu0 %v70
  %88 = vmatprep.subr.bf16.mxu0 0
  %89 = vmatpush2.bf16.msra.mxu0 0
  %90 = vmatprep.subr.bf16.mxu0 0
  %91 = vmatpush2.bf16.msra.mxu0 0
  %92 = vmatprep.subr.bf16.mxu0 0
  %93 = vmatpush2.bf16.msra.mxu0 0
  %94 = vmatprep.subr.bf16.mxu0 0
  %95 = vmatpush2.bf16.msra.mxu0 0
  %96 = vmatprep.subr.bf16.mxu0 0
  %97 = vmatpush2.bf16.msra.mxu0 0
  %98 = vmatprep.subr.bf16.mxu0 0
  %99 = vmatpush2.bf16.msra.mxu0 0
  %100 = vmatprep.subr.bf16.mxu0 0
  %101 = vmatpush2.bf16.msra.mxu0 0
  %102 = vmatprep.subr.bf16.mxu0 0
  %103 = vmatpush2.bf16.msra.mxu0 0
  %104 = vmatprep.mubr.bf16.mxu0 0
  %105 = vmatmul.mubr.bf16.gmra.mxu0 %v54
  %v106 = vpop.f32.mrf.mxu0
  %v107 = vadd.f32 0.0, %v106
  %v108 = vpop.f32.mrf.mxu0
  %v109 = vpop.f32.mrf.mxu0
  %v110 = vadd.f32 0.0, %v109
  %v111 = vpop.f32.mrf.mxu0
  %112 = vmatprep.mubr.bf16.mxu0 0
  %113 = vmatmul.mubr.bf16.gmra.mxu0 %v57
  %v114 = vpop.f32.mrf.mxu0
  %v115 = vadd.f32 0.0, %v114
  %v116 = vpop.f32.mrf.mxu0
  %v117 = vpop.f32.mrf.mxu0
  %v118 = vadd.f32 0.0, %v117
  %v119 = vpop.f32.mrf.mxu0
  %120 = vmatprep.mubr.bf16.mxu0 0
  %121 = vmatmul.mubr.bf16.gmra.mxu0 %v60
  %v122 = vpop.f32.mrf.mxu0
  %v123 = vadd.f32 0.0, %v122
  %v124 = vpop.f32.mrf.mxu0
  %v125 = vpop.f32.mrf.mxu0
  %v126 = vadd.f32 0.0, %v125
  %v127 = vpop.f32.mrf.mxu0
  %128 = vmatprep.mubr.bf16.mxu0 0
  %129 = vmatmul.mubr.bf16.gmra.mxu0 %v63
  %v130 = vpop.f32.mrf.mxu0
  %v131 = vadd.f32 0.0, %v130
  %v132 = vpop.f32.mrf.mxu0
  %v133 = vpop.f32.mrf.mxu0
  %v134 = vadd.f32 0.0, %v133
  %v135 = vpop.f32.mrf.mxu0
  %136 = vdwg.mxu0
  %v137 = vadd.f32 %v31, %v107
  %v138 = vadd.f32 %v32, %v110
  %v139 = vadd.f32 %v33, %v115
  %v140 = vadd.f32 %v34, %v118
  %v141 = vadd.f32 %v35, %v123
  %v142 = vadd.f32 %v36, %v126
  %v143 = vadd.f32 %v37, %v131
  %v144 = vadd.f32 %v38, %v134
  %vm145 = vcmask 261120
  %146 = vst.msk [vmem:[#allocation2] sm:$0xff] %vm145, %v137
  %147 = vst.msk [vmem:[#allocation2 + $0x8] sm:$0xff] %vm145, %v138
  %148 = vst.msk [vmem:[#allocation2 + $0x10] sm:$0xff] %vm145, %v139
  %149 = vst.msk [vmem:[#allocation2 + $0x18] sm:$0xff] %vm145, %v140
  %150 = vst.msk [vmem:[#allocation2 + $0x20] sm:$0xff] %vm145, %v141
  %151 = vst.msk [vmem:[#allocation2 + $0x28] sm:$0xff] %vm145, %v142
  %152 = vst.msk [vmem:[#allocation2 + $0x30] sm:$0xff] %vm145, %v143
  %153 = vst.msk [vmem:[#allocation2 + $0x38] sm:$0xff] %vm145, %v144
  // Predicated region
  $region22: #{fused_matmul.1} parent=0 // pred_check
    %p154 = pneg %p18
  $region23: #{fused_matmul.1} parent=0 // pred_check_branch
    %156 = sbr.rel (%p154) target = $region25
  $region24: #{fused_matmul.1} parent=0 // pred_region
    %v157 = vld [vmem:[#allocation2] sm:$0xff]
    %v158 = vld [vmem:[#allocation2 + $0x8] sm:$0xff]
    %v159 = vld [vmem:[#allocation2 + $0x10] sm:$0xff]
    %v160 = vld [vmem:[#allocation2 + $0x18] sm:$0xff]
    %v161 = vld [vmem:[#allocation2 + $0x20] sm:$0xff]
    %v162 = vld [vmem:[#allocation2 + $0x28] sm:$0xff]
    %v163 = vld [vmem:[#allocation2 + $0x30] sm:$0xff]
    %v164 = vld [vmem:[#allocation2 + $0x38] sm:$0xff]
    %v165 = vld [vmem:[%s2] sm:$0x1]
    %v167 = vlaneseq
    %v168 = vshrl.u32 %v167, 7
    %v169 = vsub.s32 0, %v168
    %v170 = vrot.slane %v165, %v169
    %v172 = vmul.f32 %v157, %v170
    %v173 = vmul.f32 %v158, %v170
    %v174 = vmul.f32 %v159, %v170
    %v175 = vmul.f32 %v160, %v170
    %v176 = vmul.f32 %v161, %v170
    %v177 = vmul.f32 %v162, %v170
    %v178 = vmul.f32 %v163, %v170
    %v179 = vmul.f32 %v164, %v170
    %v180 = vld [vmem:[%s3] sm:$0x1]
    %v182 = vlaneseq
    %v183 = vshrl.u32 %v182, 7
    %v184 = vsub.s32 0, %v183
    %v185 = vrot.slane %v180, %v184
    %v187 = vadd.f32 %v172, %v185
    %v188 = vadd.f32 %v173, %v185
    %v189 = vadd.f32 %v174, %v185
    %v190 = vadd.f32 %v175, %v185
    %v191 = vadd.f32 %v176, %v185
    %v192 = vadd.f32 %v177, %v185
    %v193 = vadd.f32 %v178, %v185
    %v194 = vadd.f32 %v179, %v185
    %v195 = vmul.f32 %v187, 0.5
    %v196 = vmul.f32 %v188, 0.5
    %v197 = vmul.f32 %v189, 0.5
    %v198 = vmul.f32 %v190, 0.5
    %v199 = vmul.f32 %v191, 0.5
    %v200 = vmul.f32 %v192, 0.5
    %v201 = vmul.f32 %v193, 0.5
    %v202 = vmul.f32 %v194, 0.5
    %v203 = vtanh.pop %v195
    %v204 = vtanh.pop %v196
    %v205 = vtanh.pop %v197
    %v206 = vtanh.pop %v198
    %v207 = vtanh.pop %v199
    %v208 = vtanh.pop %v200
    %v209 = vtanh.pop %v201
    %v210 = vtanh.pop %v202
    %v211 = vadd.f32 %v203, 1.0
    %v212 = vadd.f32 %v204, 1.0
    %v213 = vadd.f32 %v205, 1.0
    %v214 = vadd.f32 %v206, 1.0
    %v215 = vadd.f32 %v207, 1.0
    %v216 = vadd.f32 %v208, 1.0
    %v217 = vadd.f32 %v209, 1.0
    %v218 = vadd.f32 %v210, 1.0
    %v219 = vmul.f32 %v211, 0.5
    %v220 = vmul.f32 %v212, 0.5
    %v221 = vmul.f32 %v213, 0.5
    %v222 = vmul.f32 %v214, 0.5
    %v223 = vmul.f32 %v215, 0.5
    %v224 = vmul.f32 %v216, 0.5
    %v225 = vmul.f32 %v217, 0.5
    %v226 = vmul.f32 %v218, 0.5
    %v227 = vmul.f32 %v187, %v219
    %v228 = vmul.f32 %v188, %v220
    %v229 = vmul.f32 %v189, %v221
    %v230 = vmul.f32 %v190, %v222
    %v231 = vmul.f32 %v191, %v223
    %v232 = vmul.f32 %v192, %v224
    %v233 = vmul.f32 %v193, %v225
    %v234 = vmul.f32 %v194, %v226
    %v235 = vpack.c.bf16 %v228, %v227
    %v236 = vpack.c.bf16 %v230, %v229
    %v237 = vpack.c.bf16 %v232, %v231
    %v238 = vpack.c.bf16 %v234, %v233
    %v243 = vunpack.c.l.b16 %v235
    %v244 = vunpack.c.h.b16 %v235
    %v245 = vunpack.c.l.b16 %v236
    %v246 = vunpack.c.h.b16 %v236
    %v247 = vunpack.c.l.b16 %v237
    %v248 = vunpack.c.h.b16 %v237
    %v249 = vunpack.c.l.b16 %v238
    %v250 = vunpack.c.h.b16 %v238
    %v251 = vpack.c.b16 %v243, %v243
    %v252 = vpack.c.b16 %v244, %v244
    %v253 = vpack.c.b16 %v245, %v245
    %v254 = vpack.c.b16 %v246, %v246
    %v255 = vpack.c.b16 %v247, %v247
    %v256 = vpack.c.b16 %v248, %v248
    %v257 = vpack.c.b16 %v249, %v249
    %v258 = vpack.c.b16 %v250, %v250
    %vm267 = vcmask 257024
    %268 = vst.msk [vmem:[%s4] sm:$0xf] %vm267, %v251
    %269 = vst.msk [vmem:[%s4 + $0x4] sm:$0xf] %vm267, %v252
    %270 = vst.msk [vmem:[%s4 + $0x8] sm:$0xf] %vm267, %v253
    %271 = vst.msk [vmem:[%s4 + $0xc] sm:$0xf] %vm267, %v254
    %272 = vst.msk [vmem:[%s4 + $0x10] sm:$0xf] %vm267, %v255
    %273 = vst.msk [vmem:[%s4 + $0x14] sm:$0xf] %vm267, %v256
    %274 = vst.msk [vmem:[%s4 + $0x18] sm:$0xf] %vm267, %v257
    %275 = vst.msk [vmem:[%s4 + $0x1c] sm:$0xf] %vm267, %v258
  $region25: #{fused_matmul.1} parent=0 // pred_fallthru
    _
  // Predicated region
  $region26: #{fused_matmul.1} parent=0 // pred_check
    _
  $region27: #{fused_matmul.1} parent=0 // pred_check_branch
    %277 = sbr.rel (0) target = $region29
  $region28: #{fused_matmul.1} parent=0 // pred_region
    _
  $region29: #{fused_matmul.1} parent=0 // pred_fallthru
    _
  // Predicated region
  $region30: #{fused_matmul.1} parent=0 // pred_check
    _
  $region31: #{fused_matmul.1} parent=0 // pred_check_branch
    %279 = sbr.rel (0) target = $region33
  $region32: #{fused_matmul.1} parent=0 // pred_region
    _
  $region33: #{fused_matmul.1} parent=0 // pred_fallthru
    _

</llo_original>
